<compile_context>
chip_gen: v5e
topology: v5e:2x2
jax: 0.10.0
libtpu: 0.0.40
codegen_flags: <defaults>
</compile_context>

<pallas_src>
import functools

import jax
import jax.numpy as jnp
from jax.experimental import pallas as pl
from jax.experimental.pallas import tpu as pltpu

BN_EPS = 1e-5


def _linear1_stats_kernel(x_ref, w1_ref, b1_ref, h_ref, sum_ref, ssq_ref):
    """Pass 1: h = x @ W1 + b1 (bf16 MXU, f32 acc) and batch-stat accumulation."""
    @pl.when(pl.program_id(0) == 0)
    def _():
        sum_ref[...] = jnp.zeros_like(sum_ref)
        ssq_ref[...] = jnp.zeros_like(ssq_ref)

    x_bf16 = x_ref[...].astype(jnp.bfloat16)
    h = jnp.dot(x_bf16, w1_ref[...], preferred_element_type=jnp.float32)
    h = h + b1_ref[...]                       # f32 bias add
    h_ref[...] = h
    # Single-pass statistics: accumulate sum and sum-of-squares in f32.
    sum_ref[...] += jnp.sum(h, axis=0, keepdims=True)
    ssq_ref[...] += jnp.sum(h * h, axis=0, keepdims=True)


def _bn_relu_linear2_kernel(h_ref, sum_ref, ssq_ref, gamma_ref, beta_ref,
                            w2_ref, b2_ref, o_ref, *, batch_size):
    """Pass 2: BatchNorm (full-batch stats, biased var) -> ReLU -> a @ W2 + b2."""
    inv_b = 1.0 / batch_size
    mean = sum_ref[...] * inv_b
    var = ssq_ref[...] * inv_b - mean * mean          # E[h^2] - E[h]^2
    inv_std = jax.lax.rsqrt(var + BN_EPS)             # EUP slot (cheap)
    scale = gamma_ref[...] * inv_std
    shift = beta_ref[...] - mean * scale
    a = jnp.maximum(h_ref[...] * scale + shift, 0.0)  # f32 VPU math
    a_bf16 = a.astype(jnp.bfloat16)
    out = jnp.dot(a_bf16, w2_ref[...], preferred_element_type=jnp.float32)
    o_ref[...] = (out + b2_ref[...]).astype(o_ref.dtype)


def mlp_forward(x, w1, b1, gamma, beta, w2, b2, *, block_b=128):
    B, d_in = x.shape
    hidden = w1.shape[1]
    d_out = w2.shape[1]

    block_b = min(block_b, B)
    assert B % block_b == 0, "batch must be a multiple of the batch tile"
    n_b = B // block_b

    # Weights cast to bf16 once outside the kernel: halves their HBM->VMEM
    # footprint; MXU runs bf16 with f32 accumulation.
    w1_bf16 = w1.astype(jnp.bfloat16)
    w2_bf16 = w2.astype(jnp.bfloat16)
    f32 = jnp.float32

    # TODO(synk): for very large hidden dims (e.g. 4096) add a K-grid axis with
    # a VMEM accumulator for the second matmul instead of a full-resident W2.

    # ------------------ Pass 1: Linear1 + batch statistics ------------------
    cost1 = pl.CostEstimate(
        flops=2 * B * d_in * hidden + 4 * B * hidden,
        transcendentals=0,
        bytes_accessed=(x.size * 4 + w1_bf16.size * 2 + b1.size * 4
                        + B * hidden * 4 + 2 * hidden * 4),
    )
    h, h_sum, h_ssq = pl.pallas_call(
        _linear1_stats_kernel,
        out_shape=(
            jax.ShapeDtypeStruct((B, hidden), f32),
            jax.ShapeDtypeStruct((1, hidden), f32),
            jax.ShapeDtypeStruct((1, hidden), f32),
        ),
        grid=(n_b,),
        in_specs=[
            pl.BlockSpec((block_b, d_in), lambda i: (i, 0)),   # x streams
            pl.BlockSpec((d_in, hidden), lambda i: (0, 0)),    # W1 resident
            pl.BlockSpec((1, hidden), lambda i: (0, 0)),       # b1 resident
        ],
        out_specs=(
            pl.BlockSpec((block_b, hidden), lambda i: (i, 0)),  # h streams out
            pl.BlockSpec((1, hidden), lambda i: (0, 0)),        # sum accumulator
            pl.BlockSpec((1, hidden), lambda i: (0, 0)),        # sumsq accumulator
        ),
        compiler_params=pltpu.CompilerParams(
            dimension_semantics=("arbitrary",),     # stats accumulate over batch
            vmem_limit_bytes=48 * 1024 * 1024,      # fits v7x's 64 MiB physical
        ),
        cost_estimate=cost1,
    )(x, w1_bf16, b1)

    # ------------------ Pass 2: BN -> ReLU -> Linear2 ------------------------
    cost2 = pl.CostEstimate(
        flops=2 * B * hidden * d_out + 6 * B * hidden,
        transcendentals=n_b * hidden,
        bytes_accessed=(B * hidden * 4 + w2_bf16.size * 2 + b2.size * 4
                        + (gamma.size + beta.size + 2 * hidden) * 4
                        + B * d_out * 4),
    )
    out = pl.pallas_call(
        functools.partial(_bn_relu_linear2_kernel, batch_size=float(B)),
        out_shape=jax.ShapeDtypeStruct((B, d_out), x.dtype),
        grid=(n_b,),
        in_specs=[
            pl.BlockSpec((block_b, hidden), lambda i: (i, 0)),  # h streams
            pl.BlockSpec((1, hidden), lambda i: (0, 0)),        # sum
            pl.BlockSpec((1, hidden), lambda i: (0, 0)),        # sumsq
            pl.BlockSpec((1, hidden), lambda i: (0, 0)),        # gamma
            pl.BlockSpec((1, hidden), lambda i: (0, 0)),        # beta
            pl.BlockSpec((hidden, d_out), lambda i: (0, 0)),    # W2 resident
            pl.BlockSpec((1, d_out), lambda i: (0, 0)),         # b2 resident
        ],
        out_specs=pl.BlockSpec((block_b, d_out), lambda i: (i, 0)),
        compiler_params=pltpu.CompilerParams(
            dimension_semantics=("parallel",),      # independent batch tiles
            vmem_limit_bytes=48 * 1024 * 1024,
        ),
        cost_estimate=cost2,
    )(h, h_sum, h_ssq, gamma, beta, w2_bf16, b2)
    return out


def init_params(key, input_dim, hidden_dim, output_dim):
    """Deterministic init mirroring PyTorch nn.Linear defaults:
    U(-1/sqrt(fan_in), 1/sqrt(fan_in)) for weight and bias; BN gamma=1, beta=0."""
    k1, k2, k3, k4 = jax.random.split(key, 4)
    bound1 = 1.0 / jnp.sqrt(input_dim)
    bound2 = 1.0 / jnp.sqrt(hidden_dim)
    # stored transposed relative to PyTorch: (in, out)
    w1 = jax.random.uniform(k1, (input_dim, hidden_dim), jnp.float32, -bound1, bound1)
    b1 = jax.random.uniform(k2, (1, hidden_dim), jnp.float32, -bound1, bound1)
    gamma = jnp.ones((1, hidden_dim), jnp.float32)   # BatchNorm1d weight
    beta = jnp.zeros((1, hidden_dim), jnp.float32)   # BatchNorm1d bias
    w2 = jax.random.uniform(k3, (hidden_dim, output_dim), jnp.float32, -bound2, bound2)
    b2 = jax.random.uniform(k4, (1, output_dim), jnp.float32, -bound2, bound2)
    return w1, b1, gamma, beta, w2, b2


if __name__ == "__main__":
    key = jax.random.PRNGKey(0)
    kx, kp = jax.random.split(key)

    # Lane-dense shapes: feature dims multiples of 128, batch multiple of 8.
    B, INPUT_DIM, HIDDEN_DIM, OUTPUT_DIM = 256, 128, 256, 128
    x = jax.random.normal(kx, (B, INPUT_DIM), jnp.float32)
    params = init_params(kp, INPUT_DIM, HIDDEN_DIM, OUTPUT_DIM)

    out = mlp_forward(x, *params, block_b=128)
    jax.block_until_ready(out)

    # Pure-JAX reference with matching MXU precision (bf16 inputs, f32 acc) and
    # PyTorch training-mode BatchNorm1d semantics (centered biased variance).
    w1, b1, gamma, beta, w2, b2 = params
    h = jnp.dot(x.astype(jnp.bfloat16), w1.astype(jnp.bfloat16),
                preferred_element_type=jnp.float32) + b1
    mean = h.mean(axis=0, keepdims=True)
    var = ((h - mean) ** 2).mean(axis=0, keepdims=True)
    a = jnp.maximum((h - mean) * jax.lax.rsqrt(var + BN_EPS) * gamma + beta, 0.0)
    ref = jnp.dot(a.astype(jnp.bfloat16), w2.astype(jnp.bfloat16),
                  preferred_element_type=jnp.float32) + b2

    assert out.shape == (B, OUTPUT_DIM)
    max_err = float(jnp.max(jnp.abs(out - ref)))
    assert jnp.allclose(out, ref, atol=1e-2, rtol=1e-2), f"max_err={max_err}"

    print("KERNEL_OK")
</pallas_src>

<mosaic_0001>
module attributes {stable_mosaic.version = 11 : i64} {
  func.func @_linear1_stats_kernel(%arg0: i32, %arg1: memref<128x128xf32, #tpu.memory_space<vmem>>, %arg2: memref<128x256xbf16, #tpu.memory_space<vmem>>, %arg3: memref<1x256xf32, #tpu.memory_space<vmem>>, %arg4: memref<128x256xf32, #tpu.memory_space<vmem>>, %arg5: memref<1x256xf32, #tpu.memory_space<vmem>>, %arg6: memref<1x256xf32, #tpu.memory_space<vmem>>) attributes {dimension_semantics = [#tpu.dimension_semantics<arbitrary>], iteration_bounds = array<i64: 2>, scalar_prefetch = 0 : i64, scratch_operands = 0 : i64, tpu.core_type = #tpu.core_type<tc>, window_params = [{transform_indices = @transform_0, window_bounds = array<i64: 128, 128>}, {pipeline_mode = #tpu.pipeline_mode<synchronous>, transform_indices = @transform_1, window_bounds = array<i64: 128, 256>}, {pipeline_mode = #tpu.pipeline_mode<synchronous>, transform_indices = @transform_2, window_bounds = array<i64: 1, 256>}, {transform_indices = @transform_3, window_bounds = array<i64: 128, 256>}, {pipeline_mode = #tpu.pipeline_mode<synchronous>, transform_indices = @transform_4, window_bounds = array<i64: 1, 256>}, {pipeline_mode = #tpu.pipeline_mode<synchronous>, transform_indices = @transform_5, window_bounds = array<i64: 1, 256>}]} {
    %c0_i32 = arith.constant 0 : i32
    %0 = arith.cmpi eq, %arg0, %c0_i32 : i32
    %1 = arith.extui %0 : i1 to i32
    %c0_i32_0 = arith.constant 0 : i32
    %2 = arith.cmpi ne, %1, %c0_i32_0 : i32
    scf.if %2 {
      %cst_18 = arith.constant 0.000000e+00 : f32
      %22 = vector.broadcast %cst_18 : f32 to vector<1x256xf32>
      %c0_19 = arith.constant 0 : index
      %c0_20 = arith.constant 0 : index
      %23 = vector.load %arg5[%c0_19, %c0_20] : memref<1x256xf32, #tpu.memory_space<vmem>>, vector<1x256xf32>
      tpu.vector_store %arg5[%c0_19, %c0_20], %22 {strides = array<i32>} : memref<1x256xf32, #tpu.memory_space<vmem>>, vector<1x256xf32>,
      %cst_21 = arith.constant 0.000000e+00 : f32
      %24 = vector.broadcast %cst_21 : f32 to vector<1x256xf32>
      %c0_22 = arith.constant 0 : index
      %c0_23 = arith.constant 0 : index
      %25 = vector.load %arg6[%c0_22, %c0_23] : memref<1x256xf32, #tpu.memory_space<vmem>>, vector<1x256xf32>
      tpu.vector_store %arg6[%c0_22, %c0_23], %24 {strides = array<i32>} : memref<1x256xf32, #tpu.memory_space<vmem>>, vector<1x256xf32>,
    } else {
    }
    %c0 = arith.constant 0 : index
    %c0_1 = arith.constant 0 : index
    %3 = vector.load %arg1[%c0, %c0_1] : memref<128x128xf32, #tpu.memory_space<vmem>>, vector<128x128xf32>
    %4 = arith.truncf %3 : vector<128x128xf32> to vector<128x128xbf16>
    %c0_2 = arith.constant 0 : index
    %c0_3 = arith.constant 0 : index
    %5 = vector.load %arg2[%c0_2, %c0_3] : memref<128x256xbf16, #tpu.memory_space<vmem>>, vector<128x256xbf16>
    %cst = arith.constant dense<0.000000e+00> : vector<128x256xf32>
    %6 = tpu.matmul %4, %5, %cst {dimension_numbers = #tpu.dot_dimension_numbers<[1], [0], [0], [1], [0, 0, 1, 1], [], []>} : vector<128x128xbf16>, vector<128x256xbf16>, vector<128x256xf32> -> vector<128x256xf32>
    %c0_4 = arith.constant 0 : index
    %c0_5 = arith.constant 0 : index
    %7 = vector.load %arg3[%c0_4, %c0_5] : memref<1x256xf32, #tpu.memory_space<vmem>>, vector<1x256xf32>
    %8 = vector.broadcast %7 : vector<1x256xf32> to vector<128x256xf32>
    %9 = arith.addf %6, %8 : vector<128x256xf32>
    %c0_6 = arith.constant 0 : index
    %c0_7 = arith.constant 0 : index
    %10 = vector.load %arg4[%c0_6, %c0_7] : memref<128x256xf32, #tpu.memory_space<vmem>>, vector<128x256xf32>
    tpu.vector_store %arg4[%c0_6, %c0_7], %9 {strides = array<i32>} : memref<128x256xf32, #tpu.memory_space<vmem>>, vector<128x256xf32>,
    %c0_8 = arith.constant 0 : index
    %c0_9 = arith.constant 0 : index
    %11 = vector.load %arg5[%c0_8, %c0_9] : memref<1x256xf32, #tpu.memory_space<vmem>>, vector<1x256xf32>
    %cst_10 = arith.constant dense<0.000000e+00> : vector<256xf32>
    %12 = vector.multi_reduction <add>, %9, %cst_10 [0] : vector<128x256xf32> to vector<256xf32>
    %13 = vector.shape_cast %12 : vector<256xf32> to vector<1x256xf32>
    %14 = arith.addf %11, %13 : vector<1x256xf32>
    %c0_11 = arith.constant 0 : index
    %c0_12 = arith.constant 0 : index
    %15 = vector.load %arg5[%c0_11, %c0_12] : memref<1x256xf32, #tpu.memory_space<vmem>>, vector<1x256xf32>
    tpu.vector_store %arg5[%c0_11, %c0_12], %14 {strides = array<i32>} : memref<1x256xf32, #tpu.memory_space<vmem>>, vector<1x256xf32>,
    %c0_13 = arith.constant 0 : index
    %c0_14 = arith.constant 0 : index
    %16 = vector.load %arg6[%c0_13, %c0_14] : memref<1x256xf32, #tpu.memory_space<vmem>>, vector<1x256xf32>
    %17 = arith.mulf %9, %9 : vector<128x256xf32>
    %cst_15 = arith.constant dense<0.000000e+00> : vector<256xf32>
    %18 = vector.multi_reduction <add>, %17, %cst_15 [0] : vector<128x256xf32> to vector<256xf32>
    %19 = vector.shape_cast %18 : vector<256xf32> to vector<1x256xf32>
    %20 = arith.addf %16, %19 : vector<1x256xf32>
    %c0_16 = arith.constant 0 : index
    %c0_17 = arith.constant 0 : index
    %21 = vector.load %arg6[%c0_16, %c0_17] : memref<1x256xf32, #tpu.memory_space<vmem>>, vector<1x256xf32>
    tpu.vector_store %arg6[%c0_16, %c0_17], %20 {strides = array<i32>} : memref<1x256xf32, #tpu.memory_space<vmem>>, vector<1x256xf32>,
    return
  }
  func.func @transform_0(%arg0: i32) -> (i32, i32) {
    %c0_i32 = arith.constant 0 : i32
    %c0_i32_0 = arith.constant 0 : i32
    return %arg0, %c0_i32 : i32, i32
  }
  func.func @transform_1(%arg0: i32) -> (i32, i32) {
    %c0_i32 = arith.constant 0 : i32
    %c0_i32_0 = arith.constant 0 : i32
    %c0_i32_1 = arith.constant 0 : i32
    return %c0_i32, %c0_i32_0 : i32, i32
  }
  func.func @transform_2(%arg0: i32) -> (i32, i32) {
    %c0_i32 = arith.constant 0 : i32
    %c0_i32_0 = arith.constant 0 : i32
    %c0_i32_1 = arith.constant 0 : i32
    return %c0_i32, %c0_i32_0 : i32, i32
  }
  func.func @transform_3(%arg0: i32) -> (i32, i32) {
    %c0_i32 = arith.constant 0 : i32
    %c0_i32_0 = arith.constant 0 : i32
    return %arg0, %c0_i32 : i32, i32
  }
  func.func @transform_4(%arg0: i32) -> (i32, i32) {
    %c0_i32 = arith.constant 0 : i32
    %c0_i32_0 = arith.constant 0 : i32
    %c0_i32_1 = arith.constant 0 : i32
    return %c0_i32, %c0_i32_0 : i32, i32
  }
  func.func @transform_5(%arg0: i32) -> (i32, i32) {
    %c0_i32 = arith.constant 0 : i32
    %c0_i32_0 = arith.constant 0 : i32
    %c0_i32_1 = arith.constant 0 : i32
    return %c0_i32, %c0_i32_0 : i32, i32
  }
}

</mosaic_0001>

<llo_original>
// kernel: tpu_custom_call.1
$region0: #{tpu_custom_call.1}
  #allocation0 [shape = 'u32[]', space=smem, size = 0x4, offset = 0x4, fixed_abs, tag = 'smem constant byte address 0x4 - core index']
  #allocation1 [shape = 'u32[72,128]{1,0:T(1,128)}', space=vmem, size = 0x9000, scoped, tag = 'internal scratch']
  %s0 = inlined_call_operand.hbm [shape: f32[256,128], index: 0, kind: input, shape index: {}]
  %s1 = inlined_call_operand.hbm [shape: bf16[128,256], index: 1, kind: input, shape index: {}]
  %s2 = inlined_call_operand.hbm [shape: f32[1,256], index: 2, kind: input, shape index: {}]
  %s3 = inlined_call_operand.hbm [shape: f32[256,256], index: 3, kind: output, shape index: {0}]
  %s4 = inlined_call_operand.hbm [shape: f32[1,256], index: 4, kind: output, shape index: {1}]
  %s5 = inlined_call_operand.hbm [shape: f32[1,256], index: 5, kind: output, shape index: {2}]
  %6 = xla_tuple %s3, %s4, %s5
  %s7 = sld [smem:[#allocation0]]
  $region77: #{tpu_custom_call.1} parent=0
    _
  %s9 = ssub.s32 1, %s7
  %s10 = scalar_select 0, %s9, %s7
  $region1: #{tpu_custom_call.1} parent=0
    #allocation2 [shape = 'u8[131072]{0}', space=vmem, size = 0x20000, scoped, tag = 'input window, operand 0']
    #allocation3 [shape = 's32[2]{0}', space=sflag, size = 0x8, scoped, tag = 'scoped memory for tpu_custom_call.1']
    #allocation4 [shape = 's32[2]{0}', space=sflag, size = 0x8, scoped, tag = 'scoped memory for tpu_custom_call.1']
    #allocation5 [shape = 'u8[65536]{0}', space=vmem, size = 0x10000, scoped, tag = 'input window, operand 1, single buffered']
    #allocation6 [shape = 's32[1]{0}', space=sflag, size = 0x4, scoped, tag = 'scoped memory for tpu_custom_call.1']
    #allocation7 [shape = 'u8[1024]{0}', space=vmem, size = 0x400, scoped, tag = 'input window, operand 2, single buffered']
    #allocation8 [shape = 'u8[262144]{0}', space=vmem, size = 0x40000, scoped, tag = 'output window, operand 0']
    #allocation9 [shape = 'u8[1024]{0}', space=vmem, size = 0x400, scoped, tag = 'output window, operand 1, single buffered']
    #allocation10 [shape = 's32[1]{0}', space=sflag, size = 0x4, scoped, tag = 'scoped memory for tpu_custom_call.1']
    #allocation11 [shape = 'u8[1024]{0}', space=vmem, size = 0x400, scoped, tag = 'output window, operand 2, single buffered']
    %11 = vsyncpa [#allocation3], 0
    %s12 = scalar_lea.sflag [#allocation3], 1
    %13 = vsyncpa %s12, 0
    %14 = vsyncpa [#allocation6], 0
    %15 = vsyncpa [#allocation4], 0
    %s16 = scalar_lea.sflag [#allocation4], 1
    %17 = vsyncpa %s16, 0
    %18 = vsyncpa [#allocation10], 0
    loop: start=0, step=1, limit=4
    $region2: #{tpu_custom_call.1} parent=1 // loop_pre_header
      _
    $region3: #{tpu_custom_call.1} parent=1 // loop_header
      %s20 = sphi 0, %s24
      %p21 = scmp.ge.s32.totalorder %s20, 4
      %s30 = sphi 0, %s32
      %s33 = sphi 0, %s30
      %s34 = sphi 0, %s33
      %s50 = sphi 0, %s34
      %s54 = sphi 0, %s54
      %s56 = sphi 0, %s54
      %s57 = sphi 0, %s56
      %s71 = sphi 0, %s57
      %s75 = sphi 0, %s75
      %s77 = sphi 0, %s75
      %s78 = sphi 0, %s77
      %s92 = sphi 0, %s78
      %s98 = sphi 0, %s100
      %s101 = sphi 0, %s98
      %s102 = sphi 0, %s101
      %s118 = sphi 0, %s102
      %s122 = sphi 0, %s122
      %s124 = sphi 0, %s122
      %s125 = sphi 0, %s124
      %s139 = sphi 0, %s125
      %s143 = sphi 0, %s143
      %s145 = sphi 0, %s143
      %s146 = sphi 0, %s145
      %s160 = sphi 0, %s146
    $region4: #{tpu_custom_call.1} parent=1 // loop_header_branch
      %23 = sbr.rel (%p21) target = $region8
    $region5: #{tpu_custom_call.1} parent=1 // loop_body
      %s25 = ssub.s32 %s20, 1
      %s26 = ssub.s32 %s20, 2
      %s27 = sadd.s32 %s20, 1
      %s28 = ssub.s32 %s20, %s27
      %p29 = scmp.eq.s32.totalorder %s28, 0
      %s31 = sadd.s32 %s30, 1
      %s32 = scalar_select %p29, %s30, %s31
      %p35 = pneg %p29
      %p36 = scmp.eq.s32.totalorder %s20, 1
      %p37 = por %p35, %p36
      %p38 = scmp.ne.s32.totalorder %s30, %s33
      %p39 = scmp.eq.s32.totalorder %s20, 0
      %p40 = por %p38, %p39
      %p41 = scmp.ne.s32.totalorder %s30, %s33
      %p42 = scmp.eq.s32.totalorder %s25, 1
      %p43 = por %p41, %p42
      %p44 = scmp.ne.s32.totalorder %s33, %s34
      %p45 = scmp.eq.s32.totalorder %s25, 0
      %p46 = por %p44, %p45
      %p47 = scmp.ne.s32.totalorder %s33, %s34
      %p48 = scmp.eq.s32.totalorder %s26, 1
      %p49 = por %p47, %p48
      %p51 = scmp.ne.s32.totalorder %s34, %s50
      %p52 = scmp.eq.s32.totalorder %s26, 0
      %p53 = por %p51, %p52
      %s55 = sadd.s32 %s54, 1
      %p58 = scmp.eq.s32.totalorder %s20, 1
      %p59 = scmp.ne.s32.totalorder %s54, %s56
      %p60 = scmp.eq.s32.totalorder %s20, 0
      %p61 = por %p59, %p60
      %p62 = scmp.ne.s32.totalorder %s54, %s56
      %p63 = scmp.eq.s32.totalorder %s25, 1
      %p64 = por %p62, %p63
      %p65 = scmp.ne.s32.totalorder %s56, %s57
      %p66 = scmp.eq.s32.totalorder %s25, 0
      %p67 = por %p65, %p66
      %p68 = scmp.ne.s32.totalorder %s56, %s57
      %p69 = scmp.eq.s32.totalorder %s26, 1
      %p70 = por %p68, %p69
      %p72 = scmp.ne.s32.totalorder %s57, %s71
      %p73 = scmp.eq.s32.totalorder %s26, 0
      %p74 = por %p72, %p73
      %s76 = sadd.s32 %s75, 1
      %p79 = scmp.eq.s32.totalorder %s20, 1
      %p80 = scmp.ne.s32.totalorder %s75, %s77
      %p81 = scmp.eq.s32.totalorder %s20, 0
      %p82 = por %p80, %p81
      %p83 = scmp.ne.s32.totalorder %s75, %s77
      %p84 = scmp.eq.s32.totalorder %s25, 1
      %p85 = por %p83, %p84
      %p86 = scmp.ne.s32.totalorder %s77, %s78
      %p87 = scmp.eq.s32.totalorder %s25, 0
      %p88 = por %p86, %p87
      %p89 = scmp.ne.s32.totalorder %s77, %s78
      %p90 = scmp.eq.s32.totalorder %s26, 1
      %p91 = por %p89, %p90
      %p93 = scmp.ne.s32.totalorder %s78, %s92
      %p94 = scmp.eq.s32.totalorder %s26, 0
      %p95 = por %p93, %p94
      %s96 = ssub.s32 %s20, %s27
      %p97 = scmp.eq.s32.totalorder %s96, 0
      %s99 = sadd.s32 %s98, 1
      %s100 = scalar_select %p97, %s98, %s99
      %p103 = pneg %p97
      %p104 = scmp.eq.s32.totalorder %s20, 1
      %p105 = por %p103, %p104
      %p106 = scmp.ne.s32.totalorder %s98, %s101
      %p107 = scmp.eq.s32.totalorder %s20, 0
      %p108 = por %p106, %p107
      %p109 = scmp.ne.s32.totalorder %s98, %s101
      %p110 = scmp.eq.s32.totalorder %s25, 1
      %p111 = por %p109, %p110
      %p112 = scmp.ne.s32.totalorder %s101, %s102
      %p113 = scmp.eq.s32.totalorder %s25, 0
      %p114 = por %p112, %p113
      %p115 = scmp.ne.s32.totalorder %s101, %s102
      %p116 = scmp.eq.s32.totalorder %s26, 1
      %p117 = por %p115, %p116
      %p119 = scmp.ne.s32.totalorder %s102, %s118
      %p120 = scmp.eq.s32.totalorder %s26, 0
      %p121 = por %p119, %p120
      %s123 = sadd.s32 %s122, 1
      %p126 = scmp.eq.s32.totalorder %s20, 1
      %p127 = scmp.ne.s32.totalorder %s122, %s124
      %p128 = scmp.eq.s32.totalorder %s20, 0
      %p129 = por %p127, %p128
      %p130 = scmp.ne.s32.totalorder %s122, %s124
      %p131 = scmp.eq.s32.totalorder %s25, 1
      %p132 = por %p130, %p131
      %p133 = scmp.ne.s32.totalorder %s124, %s125
      %p134 = scmp.eq.s32.totalorder %s25, 0
      %p135 = por %p133, %p134
      %p136 = scmp.ne.s32.totalorder %s124, %s125
      %p137 = scmp.eq.s32.totalorder %s26, 1
      %p138 = por %p136, %p137
      %p140 = scmp.ne.s32.totalorder %s125, %s139
      %p141 = scmp.eq.s32.totalorder %s26, 0
      %p142 = por %p140, %p141
      %s144 = sadd.s32 %s143, 1
      %p147 = scmp.eq.s32.totalorder %s20, 1
      %p148 = scmp.ne.s32.totalorder %s143, %s145
      %p149 = scmp.eq.s32.totalorder %s20, 0
      %p150 = por %p148, %p149
      %p151 = scmp.ne.s32.totalorder %s143, %s145
      %p152 = scmp.eq.s32.totalorder %s25, 1
      %p153 = por %p151, %p152
      %p154 = scmp.ne.s32.totalorder %s145, %s146
      %p155 = scmp.eq.s32.totalorder %s25, 0
      %p156 = por %p154, %p155
      %p157 = scmp.ne.s32.totalorder %s145, %s146
      %p158 = scmp.eq.s32.totalorder %s26, 1
      %p159 = por %p157, %p158
      %p161 = scmp.ne.s32.totalorder %s146, %s160
      %p162 = scmp.eq.s32.totalorder %s26, 0
      %p163 = por %p161, %p162
      %p164 = scmp.le.s32.totalorder 1, %s20
      %p165 = scmp.lt.s32.totalorder %s20, 3
      %p166 = pnand %p164, %p165
      %p167 = pneg %p166
      // Predicated region
      $region9: #{tpu_custom_call.1} parent=5 // pred_check
        _
      $region10: #{tpu_custom_call.1} parent=5 // pred_check_branch
        %169 = sbr.rel (%p166) target = $region12
      $region11: #{tpu_custom_call.1} parent=5 // pred_region
        %s170 = ssub.s32 %s20, 1
        // Predicated region
        $region13: #{tpu_custom_call.1} parent=11 // pred_check
          %p171 = pneg %p67
        $region14: #{tpu_custom_call.1} parent=11 // pred_check_branch
          %173 = sbr.rel (%p171) target = $region16
        $region15: #{tpu_custom_call.1} parent=11 // pred_region
          %175 = vsyncadd [#allocation6], 0
          %s176 = sshll.u32 %s1, 4
          %s177 = int_to_ptr.hbm [resolvable:$true] %s176
          %s178 = sshll.u32 [#allocation5], 4
          %s179 = int_to_ptr.vmem [resolvable:$true] %s178
          %184 = dma.hbm_to_vmem [thread:$0]  %s177, 2048, %s179, [#allocation6], 128, 128, 8
        $region16: #{tpu_custom_call.1} parent=11 // pred_fallthru
          _
        // Predicated region
        $region17: #{tpu_custom_call.1} parent=11 // pred_check
          %p185 = pneg %p88
        $region18: #{tpu_custom_call.1} parent=11 // pred_check_branch
          %187 = sbr.rel (%p185) target = $region20
        $region19: #{tpu_custom_call.1} parent=11 // pred_region
          %189 = vsyncadd [#allocation6], 0
          %s191 = sshll.u32 %s2, 4
          %s192 = int_to_ptr.hbm [resolvable:$true] %s191
          %s193 = sshll.u32 [#allocation7], 4
          %s194 = int_to_ptr.vmem [resolvable:$true] %s193
          %196 = dma.hbm_to_vmem [thread:$0]  %s192, 32, %s194, [#allocation6]
        $region20: #{tpu_custom_call.1} parent=11 // pred_fallthru
          _
      $region12: #{tpu_custom_call.1} parent=5 // pred_fallthru
        _
      %p197 = scmp.lt.s32.totalorder %s20, 2
      // Predicated region
      $region21: #{tpu_custom_call.1} parent=5 // pred_check
        %p198 = pneg %p197
      $region22: #{tpu_custom_call.1} parent=5 // pred_check_branch
        %200 = sbr.rel (%p198) target = $region24
      $region23: #{tpu_custom_call.1} parent=5 // pred_region
        // Predicated region
        $region25: #{tpu_custom_call.1} parent=23 // pred_check
          %p201 = pneg %p40
        $region26: #{tpu_custom_call.1} parent=23 // pred_check_branch
          %203 = sbr.rel (%p201) target = $region28
        $region27: #{tpu_custom_call.1} parent=23 // pred_region
          %s204 = sand.u32 %s30, 1
          %s205 = scalar_lea.sflag [#allocation3], %s204
          %s206 = sand.u32 %s30, 1
          %s207 = smul.addr %s206, 128
          %s208 = scalar_lea.vmem [#allocation2], %s207
          %s209 = smul.u32 16, %s20
          %211 = vsyncadd %s205, 0
          %s212 = smul.addr %s209, 8
          %s213 = scalar_lea.hbm %s0, %s212
          %s214 = sshll.u32 %s213, 4
          %s215 = int_to_ptr.hbm [resolvable:$true] %s214
          %s216 = sshll.u32 %s208, 4
          %s217 = int_to_ptr.vmem [resolvable:$true] %s216
          %222 = dma.hbm_to_vmem [thread:$0]  %s215, 2048, %s217, %s205, 128, 128, 8
        $region28: #{tpu_custom_call.1} parent=23 // pred_fallthru
          _
      $region24: #{tpu_custom_call.1} parent=5 // pred_fallthru
        _
      %p223 = scmp.le.s32.totalorder 1, %s20
      %p224 = scmp.lt.s32.totalorder %s20, 3
      %p225 = pnand %p223, %p224
      %p226 = pneg %p225
      // Predicated region
      $region29: #{tpu_custom_call.1} parent=5 // pred_check
        _
      $region30: #{tpu_custom_call.1} parent=5 // pred_check_branch
        %228 = sbr.rel (%p225) target = $region32
      $region31: #{tpu_custom_call.1} parent=5 // pred_region
        %s229 = ssub.s32 %s20, 1
        %s230 = sand.u32 %s33, 1
        %s231 = scalar_lea.sflag [#allocation3], %s230
        %s232 = sand.u32 %s33, 1
        %s233 = smul.addr %s232, 128
        %s234 = scalar_lea.vmem [#allocation2], %s233
        // Predicated region
        $region33: #{tpu_custom_call.1} parent=31 // pred_check
          %p235 = pneg %p46
        $region34: #{tpu_custom_call.1} parent=31 // pred_check_branch
          %237 = sbr.rel (%p235) target = $region36
        $region35: #{tpu_custom_call.1} parent=31 // pred_region
          %239 = dma.done %s231, 2048
        $region36: #{tpu_custom_call.1} parent=31 // pred_fallthru
          _
        // Predicated region
        $region37: #{tpu_custom_call.1} parent=31 // pred_check
          %p240 = pneg %p67
        $region38: #{tpu_custom_call.1} parent=31 // pred_check_branch
          %242 = sbr.rel (%p240) target = $region40
        $region39: #{tpu_custom_call.1} parent=31 // pred_region
          %244 = dma.done [#allocation6], 2048
        $region40: #{tpu_custom_call.1} parent=31 // pred_fallthru
          _
        // Predicated region
        $region41: #{tpu_custom_call.1} parent=31 // pred_check
          %p245 = pneg %p88
        $region42: #{tpu_custom_call.1} parent=31 // pred_check_branch
          %247 = sbr.rel (%p245) target = $region44
        $region43: #{tpu_custom_call.1} parent=31 // pred_region
          %249 = dma.done [#allocation6], 32
        $region44: #{tpu_custom_call.1} parent=31 // pred_fallthru
          _
        %s250 = sand.u32 %s33, 1
        %s251 = scalar_lea.sflag [#allocation3], %s250
        %s252 = sand.u32 %s33, 1
        %s253 = smul.addr %s252, 128
        %s254 = scalar_lea.vmem [#allocation2], %s253
        %p255 = pneg %p46
        %p256 = pneg %p43
        %p257 = pneg %p67
        %p258 = pneg %p64
        %p259 = pneg %p88
        %p260 = pneg %p85
        %p261 = pneg %p114
        %p262 = pneg %p111
        %s263 = sand.u32 %s101, 1
        %s264 = scalar_lea.sflag [#allocation4], %s263
        %s265 = sand.u32 %s101, 1
        %s266 = smul.addr %s265, 256
        %s267 = scalar_lea.vmem [#allocation8], %s266
        %p268 = pneg %p135
        %p269 = pneg %p132
        %p270 = pneg %p156
        %p271 = pneg %p153
        %s272 = smul.u32 16, %s25
        %s273 = smul.u32 16, %s25
        %p274 = scmp.eq.s32.totalorder %s25, 0
        // Predicated region
        $region45: #{tpu_custom_call.1} parent=31 // pred_check
          %p275 = pneg %p274
        $region46: #{tpu_custom_call.1} parent=31 // pred_check_branch
          %277 = sbr.rel (%p275) target = $region48
        $region47: #{tpu_custom_call.1} parent=31 // pred_region
          %v278 = vlaneseq
          %vm279 = vcmp.ge.s32.totalorder %v278, 0
          %vm280 = vcmp.lt.s32.totalorder %v278, 256
          %vm281 = vmand %vm279, %vm280
          %282 = vst.msk [vmem:[#allocation9] sm:$0x3] %vm281, 0.0
          %283 = vst.msk [vmem:[#allocation11] sm:$0x3] %vm281, 0.0
        $region48: #{tpu_custom_call.1} parent=31 // pred_fallthru
          _
        %v284 = vld [vmem:[%s234] sm:$0xff]
        %v285 = vld [vmem:[%s234 + $0x8] sm:$0xff]
        %v286 = vld [vmem:[%s234 + $0x10] sm:$0xff]
        %v287 = vld [vmem:[%s234 + $0x18] sm:$0xff]
        %v288 = vld [vmem:[%s234 + $0x20] sm:$0xff]
        %v289 = vld [vmem:[%s234 + $0x28] sm:$0xff]
        %v290 = vld [vmem:[%s234 + $0x30] sm:$0xff]
        %v291 = vld [vmem:[%s234 + $0x38] sm:$0xff]
        %v292 = vld [vmem:[%s234 + $0x40] sm:$0xff]
        %v293 = vld [vmem:[%s234 + $0x48] sm:$0xff]
        %v294 = vld [vmem:[%s234 + $0x50] sm:$0xff]
        %v295 = vld [vmem:[%s234 + $0x58] sm:$0xff]
        %v296 = vld [vmem:[%s234 + $0x60] sm:$0xff]
        %v297 = vld [vmem:[%s234 + $0x68] sm:$0xff]
        %v298 = vld [vmem:[%s234 + $0x70] sm:$0xff]
        %v299 = vld [vmem:[%s234 + $0x78] sm:$0xff]
        %v300 = vpack.c.bf16 %v285, %v284
        %v301 = vpack.c.bf16 %v287, %v286
        %v302 = vpack.c.bf16 %v289, %v288
        %v303 = vpack.c.bf16 %v291, %v290
        %v304 = vpack.c.bf16 %v293, %v292
        %v305 = vpack.c.bf16 %v295, %v294
        %v306 = vpack.c.bf16 %v297, %v296
        %v307 = vpack.c.bf16 %v299, %v298
        %v308 = vld [vmem:[#allocation5] sm:$0xff]
        %v309 = vld [vmem:[#allocation5 + $0x8] sm:$0xff]
        %v310 = vld [vmem:[#allocation5 + $0x10] sm:$0xff]
        %v311 = vld [vmem:[#allocation5 + $0x18] sm:$0xff]
        %v312 = vld [vmem:[#allocation5 + $0x20] sm:$0xff]
        %v313 = vld [vmem:[#allocation5 + $0x28] sm:$0xff]
        %v314 = vld [vmem:[#allocation5 + $0x30] sm:$0xff]
        %v315 = vld [vmem:[#allocation5 + $0x38] sm:$0xff]
        %v316 = vld [vmem:[#allocation5 + $0x40] sm:$0xff]
        %v317 = vld [vmem:[#allocation5 + $0x48] sm:$0xff]
        %v318 = vld [vmem:[#allocation5 + $0x50] sm:$0xff]
        %v319 = vld [vmem:[#allocation5 + $0x58] sm:$0xff]
        %v320 = vld [vmem:[#allocation5 + $0x60] sm:$0xff]
        %v321 = vld [vmem:[#allocation5 + $0x68] sm:$0xff]
        %v322 = vld [vmem:[#allocation5 + $0x70] sm:$0xff]
        %v323 = vld [vmem:[#allocation5 + $0x78] sm:$0xff]
        %v324 = vld [vmem:[#allocation7] sm:$0x3]
        %v326 = vperm.slane %v324, 0
        %v327 = vperm.slane %v324, 1
        %v346 = vunpack.c.l.b16 %v308
        %v347 = vunpack.c.h.b16 %v308
        %v348 = vunpack.c.l.b16 %v309
        %v349 = vunpack.c.h.b16 %v309
        %v350 = vunpack.c.l.b16 %v310
        %v351 = vunpack.c.h.b16 %v310
        %v352 = vunpack.c.l.b16 %v311
        %v353 = vunpack.c.h.b16 %v311
        %v354 = vunpack.c.l.b16 %v312
        %v355 = vunpack.c.h.b16 %v312
        %v356 = vunpack.c.l.b16 %v313
        %v357 = vunpack.c.h.b16 %v313
        %v358 = vunpack.c.l.b16 %v314
        %v359 = vunpack.c.h.b16 %v314
        %v360 = vunpack.c.l.b16 %v315
        %v361 = vunpack.c.h.b16 %v315
        %v362 = vunpack.c.l.b16 %v316
        %v363 = vunpack.c.h.b16 %v316
        %v364 = vunpack.c.l.b16 %v317
        %v365 = vunpack.c.h.b16 %v317
        %v366 = vunpack.c.l.b16 %v318
        %v367 = vunpack.c.h.b16 %v318
        %v368 = vunpack.c.l.b16 %v319
        %v369 = vunpack.c.h.b16 %v319
        %v370 = vunpack.c.l.b16 %v320
        %v371 = vunpack.c.h.b16 %v320
        %v372 = vunpack.c.l.b16 %v321
        %v373 = vunpack.c.h.b16 %v321
        %v374 = vunpack.c.l.b16 %v322
        %v375 = vunpack.c.h.b16 %v322
        %v376 = vunpack.c.l.b16 %v323
        %v377 = vunpack.c.h.b16 %v323
        %v378 = vpack.c.b16 %v348, %v346
        %v379 = vpack.c.b16 %v349, %v347
        %v380 = vpack.c.b16 %v352, %v350
        %v381 = vpack.c.b16 %v353, %v351
        %v382 = vpack.c.b16 %v356, %v354
        %v383 = vpack.c.b16 %v357, %v355
        %v384 = vpack.c.b16 %v360, %v358
        %v385 = vpack.c.b16 %v361, %v359
        %v386 = vpack.c.b16 %v364, %v362
        %v387 = vpack.c.b16 %v365, %v363
        %v388 = vpack.c.b16 %v368, %v366
        %v389 = vpack.c.b16 %v369, %v367
        %v390 = vpack.c.b16 %v372, %v370
        %v391 = vpack.c.b16 %v373, %v371
        %v392 = vpack.c.b16 %v376, %v374
        %v393 = vpack.c.b16 %v377, %v375
        %410 = vmatpush.bf16.msra.mxu0 %v392
        %411 = vmatpush.bf16.msra.mxu0 %v390
        %412 = vmatpush.bf16.msra.mxu0 %v388
        %413 = vmatpush.bf16.msra.mxu0 %v386
        %414 = vmatpush.bf16.msra.mxu0 %v384
        %415 = vmatpush.bf16.msra.mxu0 %v382
        %416 = vmatpush.bf16.msra.mxu0 %v380
        %417 = vmatpush.bf16.msra.mxu0 %v378
        %418 = vmatmul.bf16.gmra.mxu0 %v300
        %v419 = vpop.f32.mrf.mxu0
        %v420 = vadd.f32 %v326, %v419
        %v421 = vpop.f32.mrf.mxu0
        %v422 = vadd.f32 %v326, %v421
        %423 = vmatmul.bf16.gmra.mxu0 %v301
        %v424 = vpop.f32.mrf.mxu0
        %v425 = vadd.f32 %v326, %v424
        %v426 = vpop.f32.mrf.mxu0
        %v427 = vadd.f32 %v326, %v426
        %428 = vmatmul.bf16.gmra.mxu0 %v302
        %v429 = vpop.f32.mrf.mxu0
        %v430 = vadd.f32 %v326, %v429
        %v431 = vpop.f32.mrf.mxu0
        %v432 = vadd.f32 %v326, %v431
        %433 = vmatmul.bf16.gmra.mxu0 %v303
        %v434 = vpop.f32.mrf.mxu0
        %v435 = vadd.f32 %v326, %v434
        %v436 = vpop.f32.mrf.mxu0
        %v437 = vadd.f32 %v326, %v436
        %438 = vmatmul.bf16.gmra.mxu0 %v304
        %v439 = vpop.f32.mrf.mxu0
        %v440 = vadd.f32 %v326, %v439
        %v441 = vpop.f32.mrf.mxu0
        %v442 = vadd.f32 %v326, %v441
        %443 = vmatmul.bf16.gmra.mxu0 %v305
        %v444 = vpop.f32.mrf.mxu0
        %v445 = vadd.f32 %v326, %v444
        %v446 = vpop.f32.mrf.mxu0
        %v447 = vadd.f32 %v326, %v446
        %448 = vmatmul.bf16.gmra.mxu0 %v306
        %v449 = vpop.f32.mrf.mxu0
        %v450 = vadd.f32 %v326, %v449
        %v451 = vpop.f32.mrf.mxu0
        %v452 = vadd.f32 %v326, %v451
        %453 = vmatmul.bf16.gmra.mxu0 %v307
        %v454 = vpop.f32.mrf.mxu0
        %v455 = vadd.f32 %v326, %v454
        %v456 = vpop.f32.mrf.mxu0
        %v457 = vadd.f32 %v326, %v456
        %458 = vdwg.mxu0
        %459 = vmatpush.bf16.msra.mxu0 %v393
        %460 = vmatpush.bf16.msra.mxu0 %v391
        %461 = vmatpush.bf16.msra.mxu0 %v389
        %462 = vmatpush.bf16.msra.mxu0 %v387
        %463 = vmatpush.bf16.msra.mxu0 %v385
        %464 = vmatpush.bf16.msra.mxu0 %v383
        %465 = vmatpush.bf16.msra.mxu0 %v381
        %466 = vmatpush.bf16.msra.mxu0 %v379
        %467 = vmatmul.bf16.gmra.mxu0 %v300
        %v468 = vpop.f32.mrf.mxu0
        %v469 = vadd.f32 %v327, %v468
        %v470 = vpop.f32.mrf.mxu0
        %v471 = vadd.f32 %v327, %v470
        %472 = vmatmul.bf16.gmra.mxu0 %v301
        %v473 = vpop.f32.mrf.mxu0
        %v474 = vadd.f32 %v327, %v473
        %v475 = vpop.f32.mrf.mxu0
        %v476 = vadd.f32 %v327, %v475
        %477 = vmatmul.bf16.gmra.mxu0 %v302
        %v478 = vpop.f32.mrf.mxu0
        %v479 = vadd.f32 %v327, %v478
        %v480 = vpop.f32.mrf.mxu0
        %v481 = vadd.f32 %v327, %v480
        %482 = vmatmul.bf16.gmra.mxu0 %v303
        %v483 = vpop.f32.mrf.mxu0
        %v484 = vadd.f32 %v327, %v483
        %v485 = vpop.f32.mrf.mxu0
        %v486 = vadd.f32 %v327, %v485
        %487 = vmatmul.bf16.gmra.mxu0 %v304
        %v488 = vpop.f32.mrf.mxu0
        %v489 = vadd.f32 %v327, %v488
        %v490 = vpop.f32.mrf.mxu0
        %v491 = vadd.f32 %v327, %v490
        %492 = vmatmul.bf16.gmra.mxu0 %v305
        %v493 = vpop.f32.mrf.mxu0
        %v494 = vadd.f32 %v327, %v493
        %v495 = vpop.f32.mrf.mxu0
        %v496 = vadd.f32 %v327, %v495
        %497 = vmatmul.bf16.gmra.mxu0 %v306
        %v498 = vpop.f32.mrf.mxu0
        %v499 = vadd.f32 %v327, %v498
        %v500 = vpop.f32.mrf.mxu0
        %v501 = vadd.f32 %v327, %v500
        %502 = vmatmul.bf16.gmra.mxu0 %v307
        %v503 = vpop.f32.mrf.mxu0
        %v504 = vadd.f32 %v327, %v503
        %v505 = vpop.f32.mrf.mxu0
        %v506 = vadd.f32 %v327, %v505
        %507 = vdwg.mxu0
        %508 = vst [vmem:[%s267] sm:$0xff] %v420
        %509 = vst [vmem:[%s267 + $0x8] sm:$0xff] %v469
        %510 = vst [vmem:[%s267 + $0x10] sm:$0xff] %v422
        %511 = vst [vmem:[%s267 + $0x18] sm:$0xff] %v471
        %512 = vst [vmem:[%s267 + $0x20] sm:$0xff] %v425
        %513 = vst [vmem:[%s267 + $0x28] sm:$0xff] %v474
        %514 = vst [vmem:[%s267 + $0x30] sm:$0xff] %v427
        %515 = vst [vmem:[%s267 + $0x38] sm:$0xff] %v476
        %516 = vst [vmem:[%s267 + $0x40] sm:$0xff] %v430
        %517 = vst [vmem:[%s267 + $0x48] sm:$0xff] %v479
        %518 = vst [vmem:[%s267 + $0x50] sm:$0xff] %v432
        %519 = vst [vmem:[%s267 + $0x58] sm:$0xff] %v481
        %520 = vst [vmem:[%s267 + $0x60] sm:$0xff] %v435
        %521 = vst [vmem:[%s267 + $0x68] sm:$0xff] %v484
        %522 = vst [vmem:[%s267 + $0x70] sm:$0xff] %v437
        %523 = vst [vmem:[%s267 + $0x78] sm:$0xff] %v486
        %524 = vst [vmem:[%s267 + $0x80] sm:$0xff] %v440
        %525 = vst [vmem:[%s267 + $0x88] sm:$0xff] %v489
        %526 = vst [vmem:[%s267 + $0x90] sm:$0xff] %v442
        %527 = vst [vmem:[%s267 + $0x98] sm:$0xff] %v491
        %528 = vst [vmem:[%s267 + $0xa0] sm:$0xff] %v445
        %529 = vst [vmem:[%s267 + $0xa8] sm:$0xff] %v494
        %530 = vst [vmem:[%s267 + $0xb0] sm:$0xff] %v447
        %531 = vst [vmem:[%s267 + $0xb8] sm:$0xff] %v496
        %532 = vst [vmem:[%s267 + $0xc0] sm:$0xff] %v450
        %533 = vst [vmem:[%s267 + $0xc8] sm:$0xff] %v499
        %534 = vst [vmem:[%s267 + $0xd0] sm:$0xff] %v452
        %535 = vst [vmem:[%s267 + $0xd8] sm:$0xff] %v501
        %536 = vst [vmem:[%s267 + $0xe0] sm:$0xff] %v455
        %537 = vst [vmem:[%s267 + $0xe8] sm:$0xff] %v504
        %538 = vst [vmem:[%s267 + $0xf0] sm:$0xff] %v457
        %539 = vst [vmem:[%s267 + $0xf8] sm:$0xff] %v506
        %v540 = vld [vmem:[#allocation9] sm:$0x3]
        %v541 = vadd.f32 %v420, %v422
        %v542 = vadd.f32 %v541, %v425
        %v543 = vadd.f32 %v542, %v427
        %v544 = vadd.f32 %v543, %v430
        %v545 = vadd.f32 %v544, %v432
        %v546 = vadd.f32 %v545, %v435
        %v547 = vadd.f32 %v546, %v437
        %v548 = vadd.f32 %v547, %v440
        %v549 = vadd.f32 %v548, %v442
        %v550 = vadd.f32 %v549, %v445
        %v551 = vadd.f32 %v550, %v447
        %v552 = vadd.f32 %v551, %v450
        %v553 = vadd.f32 %v552, %v452
        %v554 = vadd.f32 %v553, %v455
        %v555 = vadd.f32 %v554, %v457
        %v556 = vrot.slane %v555, 4
        %v557 = vadd.f32 %v555, %v556
        %v558 = vrot.slane %v557, 2
        %v559 = vadd.f32 %v557, %v558
        %v560 = vrot.slane %v559, 1
        %v561 = vadd.f32 %v559, %v560
        %v562 = vadd.f32 %v469, %v471
        %v563 = vadd.f32 %v562, %v474
        %v564 = vadd.f32 %v563, %v476
        %v565 = vadd.f32 %v564, %v479
        %v566 = vadd.f32 %v565, %v481
        %v567 = vadd.f32 %v566, %v484
        %v568 = vadd.f32 %v567, %v486
        %v569 = vadd.f32 %v568, %v489
        %v570 = vadd.f32 %v569, %v491
        %v571 = vadd.f32 %v570, %v494
        %v572 = vadd.f32 %v571, %v496
        %v573 = vadd.f32 %v572, %v499
        %v574 = vadd.f32 %v573, %v501
        %v575 = vadd.f32 %v574, %v504
        %v576 = vadd.f32 %v575, %v506
        %v577 = vrot.slane %v576, 4
        %v578 = vadd.f32 %v576, %v577
        %v579 = vrot.slane %v578, 2
        %v580 = vadd.f32 %v578, %v579
        %v581 = vrot.slane %v580, 1
        %v582 = vadd.f32 %v580, %v581
        %v585 = vrot.slane %v582, 7
        %vm586 = vcmask 1040384
        %v587 = vsel %vm586, %v561, %v585
        %v589 = vadd.f32 %v540, %v587
        %v590 = vlaneseq
        %vm591 = vcmp.ge.s32.totalorder %v590, 0
        %vm592 = vcmp.lt.s32.totalorder %v590, 256
        %vm593 = vmand %vm591, %vm592
        %594 = vst.msk [vmem:[#allocation9] sm:$0x3] %vm593, %v589
        %v595 = vld [vmem:[#allocation11] sm:$0x3]
        %v596 = vmul.f32 %v420, %v420
        %v597 = vmul.f32 %v469, %v469
        %v598 = vmul.f32 %v422, %v422
        %v599 = vmul.f32 %v471, %v471
        %v600 = vmul.f32 %v425, %v425
        %v601 = vmul.f32 %v474, %v474
        %v602 = vmul.f32 %v427, %v427
        %v603 = vmul.f32 %v476, %v476
        %v604 = vmul.f32 %v430, %v430
        %v605 = vmul.f32 %v479, %v479
        %v606 = vmul.f32 %v432, %v432
        %v607 = vmul.f32 %v481, %v481
        %v608 = vmul.f32 %v435, %v435
        %v609 = vmul.f32 %v484, %v484
        %v610 = vmul.f32 %v437, %v437
        %v611 = vmul.f32 %v486, %v486
        %v612 = vmul.f32 %v440, %v440
        %v613 = vmul.f32 %v489, %v489
        %v614 = vmul.f32 %v442, %v442
        %v615 = vmul.f32 %v491, %v491
        %v616 = vmul.f32 %v445, %v445
        %v617 = vmul.f32 %v494, %v494
        %v618 = vmul.f32 %v447, %v447
        %v619 = vmul.f32 %v496, %v496
        %v620 = vmul.f32 %v450, %v450
        %v621 = vmul.f32 %v499, %v499
        %v622 = vmul.f32 %v452, %v452
        %v623 = vmul.f32 %v501, %v501
        %v624 = vmul.f32 %v455, %v455
        %v625 = vmul.f32 %v504, %v504
        %v626 = vmul.f32 %v457, %v457
        %v627 = vmul.f32 %v506, %v506
        %v628 = vadd.f32 %v596, %v598
        %v629 = vadd.f32 %v628, %v600
        %v630 = vadd.f32 %v629, %v602
        %v631 = vadd.f32 %v630, %v604
        %v632 = vadd.f32 %v631, %v606
        %v633 = vadd.f32 %v632, %v608
        %v634 = vadd.f32 %v633, %v610
        %v635 = vadd.f32 %v634, %v612
        %v636 = vadd.f32 %v635, %v614
        %v637 = vadd.f32 %v636, %v616
        %v638 = vadd.f32 %v637, %v618
        %v639 = vadd.f32 %v638, %v620
        %v640 = vadd.f32 %v639, %v622
        %v641 = vadd.f32 %v640, %v624
        %v642 = vadd.f32 %v641, %v626
        %v643 = vrot.slane %v642, 4
        %v644 = vadd.f32 %v642, %v643
        %v645 = vrot.slane %v644, 2
        %v646 = vadd.f32 %v644, %v645
        %v647 = vrot.slane %v646, 1
        %v648 = vadd.f32 %v646, %v647
        %v649 = vadd.f32 %v597, %v599
        %v650 = vadd.f32 %v649, %v601
        %v651 = vadd.f32 %v650, %v603
        %v652 = vadd.f32 %v651, %v605
        %v653 = vadd.f32 %v652, %v607
        %v654 = vadd.f32 %v653, %v609
        %v655 = vadd.f32 %v654, %v611
        %v656 = vadd.f32 %v655, %v613
        %v657 = vadd.f32 %v656, %v615
        %v658 = vadd.f32 %v657, %v617
        %v659 = vadd.f32 %v658, %v619
        %v660 = vadd.f32 %v659, %v621
        %v661 = vadd.f32 %v660, %v623
        %v662 = vadd.f32 %v661, %v625
        %v663 = vadd.f32 %v662, %v627
        %v664 = vrot.slane %v663, 4
        %v665 = vadd.f32 %v663, %v664
        %v666 = vrot.slane %v665, 2
        %v667 = vadd.f32 %v665, %v666
        %v668 = vrot.slane %v667, 1
        %v669 = vadd.f32 %v667, %v668
        %v672 = vrot.slane %v669, 7
        %v673 = vsel %vm586, %v648, %v672
        %v675 = vadd.f32 %v595, %v673
        %676 = vst.msk [vmem:[#allocation11] sm:$0x3] %vm593, %v675
        %s677 = sand.u32 %s101, 1
        %s678 = scalar_lea.sflag [#allocation4], %s677
        %s679 = sand.u32 %s101, 1
        %s680 = smul.addr %s679, 256
        %s681 = scalar_lea.vmem [#allocation8], %s680
        // Predicated region
        $region49: #{tpu_custom_call.1} parent=31 // pred_check
          %p682 = pneg %p111
        $region50: #{tpu_custom_call.1} parent=31 // pred_check_branch
          %684 = sbr.rel (%p682) target = $region52
        $region51: #{tpu_custom_call.1} parent=31 // pred_region
          %s685 = smul.u32 16, %s25
          %687 = vsyncadd %s678, 0
          %s688 = smul.addr %s685, 2
          %s689 = smul.addr %s688, 8
          %s690 = scalar_lea.hbm %s3, %s689
          %s691 = sshll.u32 %s681, 4
          %s692 = int_to_ptr.vmem [resolvable:$true] %s691
          %s693 = sshll.u32 %s690, 4
          %s694 = int_to_ptr.hbm [resolvable:$true] %s693
          %699 = dma.vmem_to_hbm [thread:$0]  %s692, 4096, %s694, %s678, 256, 256, 16
        $region52: #{tpu_custom_call.1} parent=31 // pred_fallthru
          _
        // Predicated region
        $region53: #{tpu_custom_call.1} parent=31 // pred_check
          %p700 = pneg %p132
        $region54: #{tpu_custom_call.1} parent=31 // pred_check_branch
          %702 = sbr.rel (%p700) target = $region56
        $region55: #{tpu_custom_call.1} parent=31 // pred_region
          %704 = vsyncadd [#allocation10], 0
          %s706 = sshll.u32 [#allocation9], 4
          %s707 = int_to_ptr.vmem [resolvable:$true] %s706
          %s708 = sshll.u32 %s4, 4
          %s709 = int_to_ptr.hbm [resolvable:$true] %s708
          %711 = dma.vmem_to_hbm [thread:$0]  %s707, 32, %s709, [#allocation10]
        $region56: #{tpu_custom_call.1} parent=31 // pred_fallthru
          _
        // Predicated region
        $region57: #{tpu_custom_call.1} parent=31 // pred_check
          %p712 = pneg %p153
        $region58: #{tpu_custom_call.1} parent=31 // pred_check_branch
          %714 = sbr.rel (%p712) target = $region60
        $region59: #{tpu_custom_call.1} parent=31 // pred_region
          %716 = vsyncadd [#allocation10], 0
          %s718 = sshll.u32 [#allocation11], 4
          %s719 = int_to_ptr.vmem [resolvable:$true] %s718
          %s720 = sshll.u32 %s5, 4
          %s721 = int_to_ptr.hbm [resolvable:$true] %s720
          %723 = dma.vmem_to_hbm [thread:$0]  %s719, 32, %s721, [#allocation10]
        $region60: #{tpu_custom_call.1} parent=31 // pred_fallthru
          _
        // Predicated region
        $region61: #{tpu_custom_call.1} parent=31 // pred_check
          %p724 = pneg %p132
        $region62: #{tpu_custom_call.1} parent=31 // pred_check_branch
          %726 = sbr.rel (%p724) target = $region64
        $region63: #{tpu_custom_call.1} parent=31 // pred_region
          %728 = dma.done [#allocation10], 32
        $region64: #{tpu_custom_call.1} parent=31 // pred_fallthru
          _
        // Predicated region
        $region65: #{tpu_custom_call.1} parent=31 // pred_check
          %p729 = pneg %p153
        $region66: #{tpu_custom_call.1} parent=31 // pred_check_branch
          %731 = sbr.rel (%p729) target = $region68
        $region67: #{tpu_custom_call.1} parent=31 // pred_region
          %733 = dma.done [#allocation10], 32
        $region68: #{tpu_custom_call.1} parent=31 // pred_fallthru
          _
      $region32: #{tpu_custom_call.1} parent=5 // pred_fallthru
        _
      %p734 = scmp.le.s32.totalorder 2, %s20
      // Predicated region
      $region69: #{tpu_custom_call.1} parent=5 // pred_check
        %p735 = pneg %p734
      $region70: #{tpu_custom_call.1} parent=5 // pred_check_branch
        %737 = sbr.rel (%p735) target = $region72
      $region71: #{tpu_custom_call.1} parent=5 // pred_region
        %s738 = ssub.s32 %s20, 2
        // Predicated region
        $region73: #{tpu_custom_call.1} parent=71 // pred_check
          %p739 = pneg %p117
        $region74: #{tpu_custom_call.1} parent=71 // pred_check_branch
          %741 = sbr.rel (%p739) target = $region76
        $region75: #{tpu_custom_call.1} parent=71 // pred_region
          %s742 = sand.u32 %s102, 1
          %s743 = scalar_lea.sflag [#allocation4], %s742
          %s744 = sand.u32 %s102, 1
          %s745 = smul.addr %s744, 256
          %s746 = scalar_lea.vmem [#allocation8], %s745
          %748 = dma.done %s743, 4096
        $region76: #{tpu_custom_call.1} parent=71 // pred_fallthru
          _
      $region72: #{tpu_custom_call.1} parent=5 // pred_fallthru
        _
    $region6: #{tpu_custom_call.1} parent=1 // loop_footer
      %s24 = sadd.s32 1, %s20
    $region7: #{tpu_custom_call.1} parent=1 // loop_footer_branch
      %19 = sbr.rel target = $region3
    $region8: #{tpu_custom_call.1} parent=1 // loop_exit
      _
    %749 = vsyncpa [#allocation3], 1
    %s750 = scalar_lea.sflag [#allocation3], 1
    %751 = vsyncpa %s750, 1
    %752 = vsyncpa [#allocation6], 1
    %753 = vsyncpa [#allocation4], 1
    %s754 = scalar_lea.sflag [#allocation4], 1
    %755 = vsyncpa %s754, 1
    %756 = vsyncpa [#allocation10], 1

</llo_original>
